<compile_context>
chip_gen: v5e
topology: v5e:2x2
jax: 0.10.0
libtpu: 0.0.40
codegen_flags: <defaults>
</compile_context>

<pallas_src>
import functools

import jax
import jax.numpy as jnp
from jax import lax
from jax.experimental import pallas as pl
from jax.experimental.pallas import tpu as pltpu


def _round_up(n, m):
    return ((n + m - 1) // m) * m


def _vmem_budget():
    """(block_cap_bytes, vmem_limit_bytes) per TPU generation.

    v5e/v6e have 128 MiB physical VMEM: stream 4 MiB blocks under a 64 MiB
    scoped limit.  v7x (64 MiB VMEM) or unknown: 2 MiB blocks / 32 MiB limit.
    """
    cap, lim = 2 * 1024 * 1024, 32 * 1024 * 1024
    try:
        info = pltpu.get_tpu_info()
        vmem = int(getattr(info, "vmem_capacity_bytes", 0) or 0)
        if vmem >= 100 * 1024 * 1024:
            cap, lim = 4 * 1024 * 1024, 64 * 1024 * 1024
    except Exception:
        pass
    return cap, lim


# --------------------------------------------------------------------------
# In-kernel reduction helpers (VPU-only folds; no cross-lane XLU reduce).
# --------------------------------------------------------------------------
def _fold_rows_to_group(sq):
    """(R, X) -> (min(R, 8), X) by summing aligned row-groups of 8 (VPU adds)."""
    r = sq.shape[0]
    if r <= 8:
        return sq
    g = r // 8                       # r % 8 == 0 by construction in the wrapper
    accs = [sq[8 * j:8 * (j + 1), :] for j in range(min(g, 4))]
    for j in range(4, g):            # 4 accumulators break the add dependence chain
        accs[j % 4] = accs[j % 4] + sq[8 * j:8 * (j + 1), :]
    out = accs[0]
    for a in accs[1:]:
        out = out + a
    return out


def _fold_lanes_to_128(s8):
    """(P, X) -> (P, 128) preserving the total sum (requires X >= 128).

    Aligned 128-lane chunks are plain vreg adds; the non-multiple-of-128 tail
    is folded through one overlapping chunk gated by an iota mask, so the
    kernel never needs a cross-lane (XLU) reduction.
    """
    x_len = s8.shape[1]
    nfull = x_len // 128
    rem = x_len - nfull * 128
    accs = [s8[:, 128 * t:128 * (t + 1)] for t in range(min(nfull, 4))]
    for t in range(4, nfull):
        accs[t % 4] = accs[t % 4] + s8[:, 128 * t:128 * (t + 1)]
    acc = accs[0]
    for a in accs[1:]:
        acc = acc + a
    if rem:
        tail = s8[:, x_len - 128:x_len]          # overlaps the last full chunk
        lane = lax.broadcasted_iota(jnp.int32, tail.shape, 1)
        acc = acc + jnp.where(lane >= 128 - rem, tail, 0.0)
    return acc


# --------------------------------------------------------------------------
# Kernels.
# --------------------------------------------------------------------------
def _tv_kernel_flat(w, hw, bc, ragged, x_ref, m_ref, o_ref):
    """Lane-dense path: planes flattened to (tbc, H*W); all diffs stay in-row."""
    x = x_ref[...].astype(jnp.float32)
    if ragged:
        # Ragged last block: zero the planes past the true plane count (the DMA
        # tail is stale VMEM) with a select, before any arithmetic.
        i = pl.program_id(0)
        row = lax.broadcasted_iota(jnp.int32, (x.shape[0], 1), 0)
        x = jnp.where(row < (bc - i * x.shape[0]), x, 0.0)
    dh = x[:, w:] - x[:, :hw - w]                      # vertical: stride-W pairs
    dw = (x[:, 1:] - x[:, :hw - 1]) * m_ref[...]       # horizontal: row-wrap masked
    o_ref[0, 0] = _fold_lanes_to_128(_fold_rows_to_group(dh * dh))
    o_ref[0, 1] = _fold_lanes_to_128(_fold_rows_to_group(dw * dw))


def _tv_kernel_plane(bc, h, th, mask_planes, mask_rows, x_ref, o_ref):
    """(tbc, th, W) plane path (W already lane dense, or fallback shapes)."""
    x = x_ref[...].astype(jnp.float32)
    if mask_planes:
        i = pl.program_id(0)
        p = lax.broadcasted_iota(jnp.int32, (x.shape[0], 1, 1), 0)
        x = jnp.where(p < (bc - i * x.shape[0]), x, 0.0)
    if mask_rows:
        j = pl.program_id(1)
        valid = h - j * th
        r = lax.broadcasted_iota(jnp.int32, (1, th, 1), 1)
        x = jnp.where(r < valid, x, 0.0)
    dh = x[:, 1:, :] - x[:, :-1, :]
    if mask_rows:
        rp = lax.broadcasted_iota(jnp.int32, (1, th - 1, 1), 1)
        dh = jnp.where(rp + 1 < valid, dh, 0.0)        # drop pairs past the last valid row
    dw = x[:, :, 1:] - x[:, :, :-1]
    o_ref[0, 0] = jnp.full((8, 128), jnp.sum(dh * dh), dtype=jnp.float32)
    o_ref[0, 1] = jnp.full((8, 128), jnp.sum(dw * dw), dtype=jnp.float32)


# --------------------------------------------------------------------------
# Wrapper.
# --------------------------------------------------------------------------
def l_tv(x, tv_loss_weight: float = 1.0, block_cap_bytes=None, vmem_limit_bytes=None):
    """Total-variation loss, semantics identical to the PyTorch L_TV module.

    x: (B, C, H, W) array (any float dtype).  Returns a scalar float32.
    """
    B, C, H, W = x.shape
    bc = B * C
    hw = H * W
    itemsize = jnp.dtype(x.dtype).itemsize
    count_h = (H - 1) * W
    count_w = H * (W - 1)

    if H < 2 or W < 2:
        # Degenerate spatial extent: mirror PyTorch exactly (empty diff sums;
        # dividing by a zero count yields inf/nan, as torch does).
        xf = x.astype(jnp.float32)
        h_tv = jnp.sum(jnp.square(xf[:, :, 1:, :] - xf[:, :, :-1, :]))
        w_tv = jnp.sum(jnp.square(xf[:, :, :, 1:] - xf[:, :, :, :-1]))
        return tv_loss_weight * 2.0 * (h_tv / count_h + w_tv / count_w) / B

    cap_default, lim_default = _vmem_budget()
    cap = int(block_cap_bytes) if block_cap_bytes else cap_default
    lim = int(vmem_limit_bytes) if vmem_limit_bytes else lim_default

    cost = pl.CostEstimate(flops=6 * bc * hw, transcendentals=0,
                           bytes_accessed=bc * hw * itemsize)
    plane_lane_bytes = _round_up(hw, 128) * itemsize    # VMEM bytes of one flattened plane

    use_flat = (W % 128 != 0                  # the plane path is already lane dense otherwise
                and hw - W >= 128             # lane fold needs >= one full vreg of diffs
                and 8 * plane_lane_bytes <= cap)

    if use_flat:
        # ---------------- lane-dense flattened path ----------------
        if bc <= 8:
            tbc, nb = bc, 1                   # single block; sublane dim == full extent
        else:
            bc8 = _round_up(bc, 8)
            max_tbc = max(8, (cap // plane_lane_bytes) // 8 * 8)
            nb = max(2, -(-bc8 // max_tbc))   # >= 2 blocks so v7x megacore shards
            tbc = _round_up(-(-bc8 // nb), 8)
            nb = -(-bc // tbc)
        ragged = nb * tbc != bc
        pr = tbc if tbc < 8 else 8

        xr = x.reshape(bc, hw)                                  # free reshape, no cast
        wrap = ((jnp.arange(hw - 1, dtype=jnp.int32) % W) != (W - 1))
        wrap = wrap.astype(jnp.float32).reshape(1, hw - 1)      # row-wrap mask, read once

        partials = pl.pallas_call(
            functools.partial(_tv_kernel_flat, W, hw, bc, ragged),
            out_shape=jax.ShapeDtypeStruct((nb, 2, pr, 128), jnp.float32),
            grid=(nb,),
            in_specs=[pl.BlockSpec((tbc, hw), lambda i: (i, 0)),
                      pl.BlockSpec((1, hw - 1), lambda i: (0, 0))],
            out_specs=pl.BlockSpec((1, 2, pr, 128), lambda i: (i, 0, 0, 0)),
            compiler_params=pltpu.CompilerParams(
                dimension_semantics=("parallel",), vmem_limit_bytes=lim),
            cost_estimate=cost,
        )(xr, wrap)

        h_tv = jnp.sum(partials[:, 0])        # finish the cross-lane reduce in JAX
        w_tv = jnp.sum(partials[:, 1])
    else:
        # ---------------- (tbc, th, W) plane path ----------------
        row_bytes = _round_up(W, 128) * itemsize
        plane_bytes = _round_up(H, 8) * row_bytes
        if plane_bytes <= cap:
            th, nbh = H, 1
            tbc = max(1, cap // plane_bytes)
            nbc = -(-bc // tbc)
            if nbc == 1 and bc >= 2:
                nbc = 2                       # shard over both v7x TensorCores
            tbc = -(-bc // nbc)
            nbc = -(-bc // tbc)
        else:
            tbc, nbc = 1, bc
            rows_fit = (cap // row_bytes) // 8 * 8
            if rows_fit >= 8 and H >= 16:
                th = min(rows_fit, (H // 8) * 8)   # multiple-of-8 H tile that fits the cap
            else:
                # TODO(synk): pathological planes (tiny H with enormous W) are not
                # re-tiled along W; best effort with a whole-plane block.
                th = H
            nbh = -(-H // th)
        ragged_bc = nbc * tbc != bc
        ragged_h = nbh * th != H

        xr = x.reshape(bc, H, W)
        nbh_c = nbh
        partials = pl.pallas_call(
            functools.partial(_tv_kernel_plane, bc, H, th, ragged_bc, ragged_h),
            out_shape=jax.ShapeDtypeStruct((nbc * nbh, 2, 8, 128), jnp.float32),
            grid=(nbc, nbh),
            in_specs=[pl.BlockSpec((tbc, th, W), lambda i, j: (i, j, 0))],
            out_specs=pl.BlockSpec((1, 2, 8, 128),
                                   lambda i, j: (i * nbh_c + j, 0, 0, 0)),
            compiler_params=pltpu.CompilerParams(
                dimension_semantics=("parallel", "parallel"),
                vmem_limit_bytes=lim),
            cost_estimate=cost,
        )(xr)

        h_tv = jnp.sum(partials[:, 0, 0, 0])
        w_tv = jnp.sum(partials[:, 1, 0, 0])
        if nbh > 1:
            # Vertical pairs straddling H-tile seams (2/th of the data): tiny JAX pass.
            top = x[:, :, th - 1:(nbh - 1) * th:th, :].astype(jnp.float32)
            bot = x[:, :, th:(nbh - 1) * th + 1:th, :].astype(jnp.float32)
            h_tv = h_tv + jnp.sum(jnp.square(bot - top))

    return tv_loss_weight * 2.0 * (h_tv / count_h + w_tv / count_w) / B


def _reference(x, weight=1.0):
    xf = x.astype(jnp.float32)
    H, W = x.shape[2], x.shape[3]
    h_tv = jnp.sum(jnp.square(xf[:, :, 1:, :] - xf[:, :, :-1, :]))
    w_tv = jnp.sum(jnp.square(xf[:, :, :, 1:] - xf[:, :, :, :-1]))
    return weight * 2.0 * (h_tv / ((H - 1) * W) + w_tv / (H * (W - 1))) / x.shape[0]


if __name__ == "__main__":
    key = jax.random.PRNGKey(0)

    def check(shape, dtype=jnp.float32, **kw):
        xx = jax.random.uniform(key, shape, dtype=jnp.float32).astype(dtype)
        out = jax.block_until_ready(l_tv(xx, tv_loss_weight=1.0, **kw))
        ref = jax.block_until_ready(_reference(xx))
        assert jnp.allclose(out, ref, rtol=1e-4, atol=1e-5), (shape, str(dtype), out, ref)

    # Primary module-sized case: lane-dense flattened path, single block.
    check((2, 4, 16, 16))
    # Same shape with bf16 input (in-kernel f32 upcast).
    check((2, 4, 16, 16), dtype=jnp.bfloat16)
    # Flattened path with a ragged last block (bc=12 -> 2 blocks of 8 planes).
    check((3, 4, 16, 16))
    # Plane path (W % 128 == 0), multiple plane blocks across the grid.
    check((4, 16, 128, 128))
    # Plane path with a ragged plane block (bc=3 split across 2 blocks).
    check((1, 3, 64, 256))
    # H-tiled plane path + seam pass (forced small block cap; ragged H tile).
    check((1, 1, 72, 256), block_cap_bytes=32 * 1024)

    print("KERNEL_OK")
</pallas_src>

<mosaic_0001>
module attributes {stable_mosaic.version = 11 : i64} {
  func.func @_tv_kernel_flat(%arg0: i32, %arg1: memref<8x256xf32, #tpu.memory_space<vmem>>, %arg2: memref<1x255xf32, #tpu.memory_space<vmem>>, %arg3: memref<1x2x8x128xf32, #tpu.memory_space<vmem>>) attributes {dimension_semantics = [#tpu.dimension_semantics<parallel>], iteration_bounds = array<i64: 1>, scalar_prefetch = 0 : i64, scratch_operands = 0 : i64, tpu.core_type = #tpu.core_type<tc>, window_params = [{transform_indices = @transform_0, window_bounds = array<i64: 8, 256>}, {pipeline_mode = #tpu.pipeline_mode<synchronous>, transform_indices = @transform_1, window_bounds = array<i64: 1, 255>}, {transform_indices = @transform_2, window_bounds = array<i64: 1, 2, 8, 128>}]} {
    %c0 = arith.constant 0 : index
    %c0_0 = arith.constant 0 : index
    %0 = vector.load %arg1[%c0, %c0_0] : memref<8x256xf32, #tpu.memory_space<vmem>>, vector<8x256xf32>
    %1 = vector.extract_strided_slice %0 {offsets = [0, 16], sizes = [8, 240], strides = [1, 1]} : vector<8x256xf32> to vector<8x240xf32>
    %2 = vector.extract_strided_slice %0 {offsets = [0, 0], sizes = [8, 240], strides = [1, 1]} : vector<8x256xf32> to vector<8x240xf32>
    %3 = arith.subf %1, %2 : vector<8x240xf32>
    %4 = vector.extract_strided_slice %0 {offsets = [0, 1], sizes = [8, 255], strides = [1, 1]} : vector<8x256xf32> to vector<8x255xf32>
    %5 = vector.extract_strided_slice %0 {offsets = [0, 0], sizes = [8, 255], strides = [1, 1]} : vector<8x256xf32> to vector<8x255xf32>
    %6 = arith.subf %4, %5 : vector<8x255xf32>
    %c0_1 = arith.constant 0 : index
    %c0_2 = arith.constant 0 : index
    %7 = vector.load %arg2[%c0_1, %c0_2] : memref<1x255xf32, #tpu.memory_space<vmem>>, vector<1x255xf32>
    %8 = vector.broadcast %7 : vector<1x255xf32> to vector<8x255xf32>
    %9 = arith.mulf %6, %8 : vector<8x255xf32>
    %10 = arith.mulf %3, %3 : vector<8x240xf32>
    %11 = vector.extract_strided_slice %10 {offsets = [0, 0], sizes = [8, 128], strides = [1, 1]} : vector<8x240xf32> to vector<8x128xf32>
    %12 = vector.extract_strided_slice %10 {offsets = [0, 112], sizes = [8, 128], strides = [1, 1]} : vector<8x240xf32> to vector<8x128xf32>
    %13 = tpu.iota {dimensions = array<i32: 1>} : vector<8x128xi32>
    %c16_i32 = arith.constant 16 : i32
    %14 = vector.broadcast %c16_i32 : i32 to vector<8x128xi32>
    %15 = arith.cmpi sge, %13, %14 : vector<8x128xi32>
    %cst = arith.constant 0.000000e+00 : f32
    %16 = vector.broadcast %cst : f32 to vector<8x128xf32>
    %17 = arith.select %15, %12, %16 : vector<8x128xi1>, vector<8x128xf32>
    %18 = arith.addf %11, %17 : vector<8x128xf32>
    %c0_3 = arith.constant 0 : index
    %c0_4 = arith.constant 0 : index
    %c0_5 = arith.constant 0 : index
    %c0_6 = arith.constant 0 : index
    %19 = vector.load %arg3[%c0_3, %c0_4, %c0_5, %c0_6] : memref<1x2x8x128xf32, #tpu.memory_space<vmem>>, vector<1x1x8x128xf32>
    %20 = vector.shape_cast %19 : vector<1x1x8x128xf32> to vector<8x128xf32>
    %21 = vector.shape_cast %18 : vector<8x128xf32> to vector<1x1x8x128xf32>
    tpu.vector_store %arg3[%c0_3, %c0_4, %c0_5, %c0_6], %21 {strides = array<i32>} : memref<1x2x8x128xf32, #tpu.memory_space<vmem>>, vector<1x1x8x128xf32>,
    %22 = arith.mulf %9, %9 : vector<8x255xf32>
    %23 = vector.extract_strided_slice %22 {offsets = [0, 0], sizes = [8, 128], strides = [1, 1]} : vector<8x255xf32> to vector<8x128xf32>
    %24 = vector.extract_strided_slice %22 {offsets = [0, 127], sizes = [8, 128], strides = [1, 1]} : vector<8x255xf32> to vector<8x128xf32>
    %25 = tpu.iota {dimensions = array<i32: 1>} : vector<8x128xi32>
    %c1_i32 = arith.constant 1 : i32
    %26 = vector.broadcast %c1_i32 : i32 to vector<8x128xi32>
    %27 = arith.cmpi sge, %25, %26 : vector<8x128xi32>
    %cst_7 = arith.constant 0.000000e+00 : f32
    %28 = vector.broadcast %cst_7 : f32 to vector<8x128xf32>
    %29 = arith.select %27, %24, %28 : vector<8x128xi1>, vector<8x128xf32>
    %30 = arith.addf %23, %29 : vector<8x128xf32>
    %c0_8 = arith.constant 0 : index
    %c1 = arith.constant 1 : index
    %c0_9 = arith.constant 0 : index
    %c0_10 = arith.constant 0 : index
    %31 = vector.load %arg3[%c0_8, %c1, %c0_9, %c0_10] : memref<1x2x8x128xf32, #tpu.memory_space<vmem>>, vector<1x1x8x128xf32>
    %32 = vector.shape_cast %31 : vector<1x1x8x128xf32> to vector<8x128xf32>
    %33 = vector.shape_cast %30 : vector<8x128xf32> to vector<1x1x8x128xf32>
    tpu.vector_store %arg3[%c0_8, %c1, %c0_9, %c0_10], %33 {strides = array<i32>} : memref<1x2x8x128xf32, #tpu.memory_space<vmem>>, vector<1x1x8x128xf32>,
    return
  }
  func.func @transform_0(%arg0: i32) -> (i32, i32) {
    %c0_i32 = arith.constant 0 : i32
    %c0_i32_0 = arith.constant 0 : i32
    return %arg0, %c0_i32 : i32, i32
  }
  func.func @transform_1(%arg0: i32) -> (i32, i32) {
    %c0_i32 = arith.constant 0 : i32
    %c0_i32_0 = arith.constant 0 : i32
    %c0_i32_1 = arith.constant 0 : i32
    return %c0_i32, %c0_i32_0 : i32, i32
  }
  func.func @transform_2(%arg0: i32) -> (i32, i32, i32, i32) {
    %c0_i32 = arith.constant 0 : i32
    %c0_i32_0 = arith.constant 0 : i32
    %c0_i32_1 = arith.constant 0 : i32
    %c0_i32_2 = arith.constant 0 : i32
    return %arg0, %c0_i32, %c0_i32_0, %c0_i32_1 : i32, i32, i32, i32
  }
}

</mosaic_0001>

<llo_original>
// kernel: tpu_custom_call.1
$region0: #{tpu_custom_call.1}
  #allocation0 [shape = 'u32[]', space=smem, size = 0x4, offset = 0x4, fixed_abs, tag = 'smem constant byte address 0x4 - core index']
  #allocation1 [shape = 'u32[72,128]{1,0:T(1,128)}', space=vmem, size = 0x9000, scoped, tag = 'internal scratch']
  %s0 = inlined_call_operand.hbm [shape: f32[8,256], index: 0, kind: input, shape index: {}]
  %s1 = inlined_call_operand.hbm [shape: f32[1,255], index: 1, kind: input, shape index: {}]
  %s2 = inlined_call_operand.hbm [shape: f32[1,2,8,128], index: 2, kind: output, shape index: {}]
  %s3 = sld [smem:[#allocation0]]
  $region26: #{tpu_custom_call.1} parent=0
    _
  %s5 = ssub.s32 1, %s3
  %s6 = scalar_select 0, %s5, %s3
  $region1: #{tpu_custom_call.1} parent=0
    #allocation2 [shape = 'u8[8192]{0}', space=vmem, size = 0x2000, scoped, tag = 'input window, operand 0, single buffered']
    #allocation3 [shape = 's32[1]{0}', space=sflag, size = 0x4, scoped, tag = 'scoped memory for tpu_custom_call.1']
    #allocation4 [shape = 's32[1]{0}', space=sflag, size = 0x4, scoped, tag = 'scoped memory for tpu_custom_call.1']
    #allocation5 [shape = 'u8[1024]{0}', space=vmem, size = 0x400, scoped, tag = 'input window, operand 1, single buffered']
    #allocation6 [shape = 's32[1]{0}', space=sflag, size = 0x4, scoped, tag = 'scoped memory for tpu_custom_call.1']
    #allocation7 [shape = 'u8[8192]{0}', space=vmem, size = 0x2000, scoped, tag = 'output window, operand 0, single buffered']
    %7 = vsyncpa [#allocation3], 0
    %8 = vsyncpa [#allocation6], 0
    %9 = vsyncpa [#allocation4], 0
    // Predicated region
    $region2: #{tpu_custom_call.1} parent=1 // pred_check
      _
    $region3: #{tpu_custom_call.1} parent=1 // pred_check_branch
      %11 = sbr.rel (0) target = $region5
    $region4: #{tpu_custom_call.1} parent=1 // pred_region
      %13 = vsyncadd [#allocation3], 0
      %s15 = sshll.u32 %s0, 4
      %s16 = int_to_ptr.hbm [resolvable:$true] %s15
      %s17 = sshll.u32 [#allocation2], 4
      %s18 = int_to_ptr.vmem [resolvable:$true] %s17
      %20 = dma.hbm_to_vmem [thread:$0]  %s16, 256, %s18, [#allocation3]
    $region5: #{tpu_custom_call.1} parent=1 // pred_fallthru
      _
    // Predicated region
    $region6: #{tpu_custom_call.1} parent=1 // pred_check
      _
    $region7: #{tpu_custom_call.1} parent=1 // pred_check_branch
      %22 = sbr.rel (0) target = $region9
    $region8: #{tpu_custom_call.1} parent=1 // pred_region
      %24 = vsyncadd [#allocation6], 0
      %s26 = sshll.u32 %s1, 4
      %s27 = int_to_ptr.hbm [resolvable:$true] %s26
      %s28 = sshll.u32 [#allocation5], 4
      %s29 = int_to_ptr.vmem [resolvable:$true] %s28
      %31 = dma.hbm_to_vmem [thread:$0]  %s27, 32, %s29, [#allocation6]
    $region9: #{tpu_custom_call.1} parent=1 // pred_fallthru
      _
    // Predicated region
    $region10: #{tpu_custom_call.1} parent=1 // pred_check
      _
    $region11: #{tpu_custom_call.1} parent=1 // pred_check_branch
      %33 = sbr.rel (0) target = $region13
    $region12: #{tpu_custom_call.1} parent=1 // pred_region
      %35 = dma.done [#allocation3], 256
    $region13: #{tpu_custom_call.1} parent=1 // pred_fallthru
      _
    // Predicated region
    $region14: #{tpu_custom_call.1} parent=1 // pred_check
      _
    $region15: #{tpu_custom_call.1} parent=1 // pred_check_branch
      %37 = sbr.rel (0) target = $region17
    $region16: #{tpu_custom_call.1} parent=1 // pred_region
      %39 = dma.done [#allocation6], 32
    $region17: #{tpu_custom_call.1} parent=1 // pred_fallthru
      _
    %v40 = vld [vmem:[#allocation2] sm:$0xff]
    %v41 = vld [vmem:[#allocation2 + $0x8] sm:$0xff]
    %44 = vrot.lane.b32.xlu0 %v40, 16
    %v45 = vpop.permute.xlu0 %44
    %46 = vrot.lane.b32.xlu0 %v41, 16
    %v47 = vpop.permute.xlu0 %46
    %vm48 = vcmask 130048
    %v49 = vsel %vm48, %v45, %v47
    %v52 = vsub.f32 %v40, %v45
    %v53 = vsub.f32 %v41, %v49
    %54 = vrot.lane.b32.xlu0 %v40, 1
    %v55 = vpop.permute.xlu0 %54
    %56 = vrot.lane.b32.xlu0 %v41, 1
    %v57 = vpop.permute.xlu0 %56
    %vm58 = vcmask 7168
    %v59 = vsel %vm58, %v55, %v57
    %v62 = vsub.f32 %v40, %v55
    %v63 = vsub.f32 %v41, %v59
    %v64 = vld [vmem:[#allocation5] sm:$0x3]
    %v66 = vperm.slane %v64, 0
    %v67 = vperm.slane %v64, 1
    %68 = vrot.lane.b32.xlu0 %v66, 1
    %v69 = vpop.permute.xlu0 %68
    %70 = vrot.lane.b32.xlu0 %v67, 1
    %v71 = vpop.permute.xlu0 %70
    %v72 = vsel %vm58, %v69, %v71
    %v75 = vmul.f32 %v62, %v69
    %v76 = vmul.f32 %v63, %v72
    %v77 = vmul.f32 %v52, %v52
    %v78 = vmul.f32 %v53, %v53
    %v79 = vlaneseq
    %v80 = vand.u32 %v79, 127
    %vm81 = vcmp.ge.s32.totalorder %v80, 16
    %v82 = vsel %vm81, %v78, 0.0
    %84 = vrot.lane.b32.xlu0 %v82, 16
    %v85 = vpop.permute.xlu0 %84
    %v87 = vadd.f32 %v77, %v85
    %v88 = vadd.f32 %v78, %v85
    %91 = vrot.lane.b32.xlu0 %v87, 112
    %v92 = vpop.permute.xlu0 %91
    %93 = vrot.lane.b32.xlu0 %v88, 112
    %v94 = vpop.permute.xlu0 %93
    %vm95 = vcmask 916480
    %v96 = vsel %vm95, %v92, %v94
    %98 = vst [vmem:[#allocation7] sm:$0xff] %v96
    %v99 = vmul.f32 %v75, %v75
    %v100 = vmul.f32 %v76, %v76
    %vm101 = vcmp.ge.s32.totalorder %v80, 1
    %v102 = vsel %vm101, %v100, 0.0
    %104 = vrot.lane.b32.xlu0 %v102, 1
    %v105 = vpop.permute.xlu0 %104
    %v107 = vadd.f32 %v99, %v105
    %v108 = vadd.f32 %v100, %v105
    %111 = vrot.lane.b32.xlu0 %v107, 127
    %v112 = vpop.permute.xlu0 %111
    %113 = vrot.lane.b32.xlu0 %v108, 127
    %v114 = vpop.permute.xlu0 %113
    %vm115 = vcmask 1039360
    %v116 = vsel %vm115, %v112, %v114
    %s118 = scalar_lea.vmem [#allocation7], 8
    %119 = vst [vmem:[%s118] sm:$0xff] %v116
    // Predicated region
    $region18: #{tpu_custom_call.1} parent=1 // pred_check
      _
    $region19: #{tpu_custom_call.1} parent=1 // pred_check_branch
      %121 = sbr.rel (0) target = $region21
    $region20: #{tpu_custom_call.1} parent=1 // pred_region
      %123 = vsyncadd [#allocation4], 0
      %s124 = sshll.u32 [#allocation7], 4
      %s125 = int_to_ptr.vmem [resolvable:$true] %s124
      %s126 = sshll.u32 %s2, 4
      %s127 = int_to_ptr.hbm [resolvable:$true] %s126
      %132 = dma.vmem_to_hbm [thread:$0]  %s125, 256, %s127, [#allocation4], 128, 128, 8
    $region21: #{tpu_custom_call.1} parent=1 // pred_fallthru
      _
    // Predicated region
    $region22: #{tpu_custom_call.1} parent=1 // pred_check
      _
    $region23: #{tpu_custom_call.1} parent=1 // pred_check_branch
      %134 = sbr.rel (0) target = $region25
    $region24: #{tpu_custom_call.1} parent=1 // pred_region
      %136 = dma.done [#allocation4], 256
    $region25: #{tpu_custom_call.1} parent=1 // pred_fallthru
      _
    %137 = vsyncpa [#allocation3], 1
    %138 = vsyncpa [#allocation6], 1
    %139 = vsyncpa [#allocation4], 1

</llo_original>
